<compile_context>
chip_gen: v7x
topology: tpu7x:2x2x1
jax: 0.10.0
libtpu: 0.0.40
codegen_flags: <defaults>
</compile_context>

<pallas_src>
import functools

import jax
import jax.numpy as jnp
from jax import lax
from jax.experimental import pallas as pl
from jax.experimental.pallas import tpu as pltpu

LANES = 128           # vreg lane width; batch maps to the lane axis
SUB_ROWS = 32         # inner compute chunk: 4 f32 vregs of x per chunk
MAX_TILE_ROWS = 128   # per-grid-step DMA block: 128 rows x 128 lanes = 16K samples


def _default_compute_dtype():
    """bf16 compute on v6e/v7x (bf16-capable VPU/EUP), f32 everywhere else."""
    try:
        kind = jax.devices()[0].device_kind.lower()
    except Exception:
        return jnp.float32
    if "v6" in kind or "v7" in kind:
        return jnp.bfloat16
    return jnp.float32


def selectnet_kernel(params_ref, x_ref, o_ref, *, hidden, compute_dtype):
    # params_ref: SMEM (3*H+1,) f32 = [w1 | b1 | w2 | b2]
    # x_ref, o_ref: VMEM (tile_rows, 128) f32 — batch is lane-dense.
    tile_rows = x_ref.shape[0]

    def compute_chunk(x_f32):
        xc = x_f32.astype(compute_dtype)

        def term(j):
            w1j = params_ref[j].astype(compute_dtype)
            b1j = params_ref[hidden + j].astype(compute_dtype)
            w2j = params_ref[2 * hidden + j]                    # f32 scalar
            h = jnp.tanh(w1j * xc + b1j)                        # EUP, compute_dtype
            return w2j * h.astype(jnp.float32)                  # accumulate in f32

        # Two partial accumulators; fold the first terms into the init.
        accs = [None, None]
        for j in range(hidden):                                 # static unroll over H
            t = term(j)
            k = j & 1
            accs[k] = t if accs[k] is None else accs[k] + t
        total = accs[0] if accs[1] is None else accs[0] + accs[1]

        b2 = params_ref[3 * hidden]                             # f32 scalar
        return jax.nn.sigmoid(total + b2)

    if tile_rows <= SUB_ROWS:
        # Single small chunk (covers the tiny-batch / single-step case).
        o_ref[...] = compute_chunk(x_ref[...]).astype(o_ref.dtype)
    else:
        # Wrapper guarantees tile_rows % SUB_ROWS == 0 here.
        n_chunks = tile_rows // SUB_ROWS

        def body(c, carry):
            start = pl.multiple_of(c * SUB_ROWS, SUB_ROWS)
            x = x_ref[pl.ds(start, SUB_ROWS), :]
            o_ref[pl.ds(start, SUB_ROWS), :] = compute_chunk(x).astype(o_ref.dtype)
            return carry

        lax.fori_loop(0, n_chunks, body, 0)


def selectnet_forward(x, w1, b1, w2, b2, compute_dtype=None):
    """x: (N, 1) f32; w1, b1, w2: (H,) f32; b2: (1,) f32  ->  (N, 1) f32.

    w1 is column 0 of the first Linear's (H,1) weight; w2 is row 0 of the
    second Linear's (1,H) weight (PyTorch stores (out, in))."""
    if compute_dtype is None:
        compute_dtype = _default_compute_dtype()

    N = x.shape[0]
    H = w1.shape[0]

    # Pack all parameters into one resident SMEM operand: [w1 | b1 | w2 | b2].
    params = jnp.concatenate(
        [w1.astype(jnp.float32), b1.astype(jnp.float32),
         w2.astype(jnp.float32), b2.astype(jnp.float32).reshape(1)])

    # Lane-dense layout: rows of 128 samples on the lane axis.
    rows = pl.cdiv(N, LANES)
    if rows <= SUB_ROWS:
        tile_rows = rows                                   # one step, one chunk
    elif rows <= MAX_TILE_ROWS:
        tile_rows = pl.cdiv(rows, SUB_ROWS) * SUB_ROWS     # one step, few chunks
    else:
        tile_rows = MAX_TILE_ROWS                          # multiple parallel steps
    rows_pad = pl.cdiv(rows, tile_rows) * tile_rows
    n_pad = rows_pad * LANES

    x_flat = jnp.ravel(x)
    if n_pad != N:                                         # skip pad when not needed
        x_flat = jnp.pad(x_flat, (0, n_pad - N))
    x2d = x_flat.reshape(rows_pad, LANES)

    grid = (rows_pad // tile_rows,)

    kernel = functools.partial(selectnet_kernel, hidden=H,
                               compute_dtype=compute_dtype)

    out2d = pl.pallas_call(
        kernel,
        out_shape=jax.ShapeDtypeStruct((rows_pad, LANES), x.dtype),
        grid_spec=pltpu.PrefetchScalarGridSpec(
            num_scalar_prefetch=0,
            grid=grid,
            in_specs=[
                pl.BlockSpec(memory_space=pltpu.MemorySpace.SMEM),   # packed params
                pl.BlockSpec((tile_rows, LANES), lambda i: (i, 0)),  # x tile
            ],
            out_specs=pl.BlockSpec((tile_rows, LANES), lambda i: (i, 0)),
        ),
        compiler_params=pltpu.CompilerParams(
            dimension_semantics=("parallel",)),
    )(params, x2d)

    return out2d.reshape(n_pad, 1)[:N]


def selectnet_reference(x, w1, b1, w2, b2):
    h = jnp.tanh(x @ w1[None, :] + b1[None, :])            # (N, H)
    return jax.nn.sigmoid(h @ w2[:, None] + b2[None, :])   # (N, 1)


if __name__ == "__main__":
    key = jax.random.PRNGKey(0)
    k_x, k_w1, k_w2 = jax.random.split(key, 3)

    N = 256          # batch of scalar inputs
    H = 32           # hparams.selectnet['hidden_dim'][0]

    x = jax.random.normal(k_x, (N, 1), dtype=jnp.float32)

    # nn.init.normal_(weight, mean=0.0, std=0.01); bias = 0.0
    w1 = 0.01 * jax.random.normal(k_w1, (H,), dtype=jnp.float32)   # Linear(1,H) weight col
    b1 = jnp.zeros((H,), dtype=jnp.float32)
    w2 = 0.01 * jax.random.normal(k_w2, (H,), dtype=jnp.float32)   # Linear(H,1) weight row
    b2 = jnp.zeros((1,), dtype=jnp.float32)

    compute_dtype = _default_compute_dtype()

    out = selectnet_forward(x, w1, b1, w2, b2, compute_dtype=compute_dtype)
    out = jax.block_until_ready(out)

    ref = selectnet_reference(x, w1, b1, w2, b2)
    assert out.shape == (N, 1)

    # f32 path matches tightly; bf16-compute path (v6e/v7x) keeps an f32
    # accumulator, so only the per-term tanh carries bf16 rounding.
    tol = 1e-5 if compute_dtype == jnp.float32 else 2e-3
    assert jnp.allclose(out, ref, atol=tol, rtol=tol), "mismatch vs reference"

    print("KERNEL_OK")
</pallas_src>

<mosaic_0001>
module attributes {stable_mosaic.version = 11 : i64} {
  func.func @selectnet_kernel(%arg0: i32, %arg1: memref<97xf32, #tpu.memory_space<smem>>, %arg2: memref<2x128xf32, #tpu.memory_space<vmem>>, %arg3: memref<2x128xf32, #tpu.memory_space<vmem>>) attributes {dimension_semantics = [#tpu.dimension_semantics<parallel>], iteration_bounds = array<i64: 1>, scalar_prefetch = 0 : i64, scratch_operands = 0 : i64, tpu.core_type = #tpu.core_type<tc>, window_params = [{transform_indices = @transform_0, window_bounds = array<i64: 97>}, {transform_indices = @transform_1, window_bounds = array<i64: 2, 128>}, {transform_indices = @transform_2, window_bounds = array<i64: 2, 128>}]} {
    %c0 = arith.constant 0 : index
    %c0_0 = arith.constant 0 : index
    %0 = vector.load %arg2[%c0, %c0_0] : memref<2x128xf32, #tpu.memory_space<vmem>>, vector<2x128xf32>
    %c0_1 = arith.constant 0 : index
    %1 = memref.load %arg1[%c0_1] : memref<97xf32, #tpu.memory_space<smem>>
    %c32 = arith.constant 32 : index
    %2 = memref.load %arg1[%c32] : memref<97xf32, #tpu.memory_space<smem>>
    %c64 = arith.constant 64 : index
    %3 = memref.load %arg1[%c64] : memref<97xf32, #tpu.memory_space<smem>>
    %4 = vector.broadcast %1 : f32 to vector<2x128xf32>
    %5 = arith.mulf %4, %0 : vector<2x128xf32>
    %6 = vector.broadcast %2 : f32 to vector<2x128xf32>
    %7 = arith.addf %5, %6 : vector<2x128xf32>
    %8 = math.tanh %7 : vector<2x128xf32>
    %9 = vector.broadcast %3 : f32 to vector<2x128xf32>
    %10 = arith.mulf %9, %8 : vector<2x128xf32>
    %c1 = arith.constant 1 : index
    %11 = memref.load %arg1[%c1] : memref<97xf32, #tpu.memory_space<smem>>
    %c33 = arith.constant 33 : index
    %12 = memref.load %arg1[%c33] : memref<97xf32, #tpu.memory_space<smem>>
    %c65 = arith.constant 65 : index
    %13 = memref.load %arg1[%c65] : memref<97xf32, #tpu.memory_space<smem>>
    %14 = vector.broadcast %11 : f32 to vector<2x128xf32>
    %15 = arith.mulf %14, %0 : vector<2x128xf32>
    %16 = vector.broadcast %12 : f32 to vector<2x128xf32>
    %17 = arith.addf %15, %16 : vector<2x128xf32>
    %18 = math.tanh %17 : vector<2x128xf32>
    %19 = vector.broadcast %13 : f32 to vector<2x128xf32>
    %20 = arith.mulf %19, %18 : vector<2x128xf32>
    %c2 = arith.constant 2 : index
    %21 = memref.load %arg1[%c2] : memref<97xf32, #tpu.memory_space<smem>>
    %c34 = arith.constant 34 : index
    %22 = memref.load %arg1[%c34] : memref<97xf32, #tpu.memory_space<smem>>
    %c66 = arith.constant 66 : index
    %23 = memref.load %arg1[%c66] : memref<97xf32, #tpu.memory_space<smem>>
    %24 = vector.broadcast %21 : f32 to vector<2x128xf32>
    %25 = arith.mulf %24, %0 : vector<2x128xf32>
    %26 = vector.broadcast %22 : f32 to vector<2x128xf32>
    %27 = arith.addf %25, %26 : vector<2x128xf32>
    %28 = math.tanh %27 : vector<2x128xf32>
    %29 = vector.broadcast %23 : f32 to vector<2x128xf32>
    %30 = arith.mulf %29, %28 : vector<2x128xf32>
    %31 = arith.addf %10, %30 : vector<2x128xf32>
    %c3 = arith.constant 3 : index
    %32 = memref.load %arg1[%c3] : memref<97xf32, #tpu.memory_space<smem>>
    %c35 = arith.constant 35 : index
    %33 = memref.load %arg1[%c35] : memref<97xf32, #tpu.memory_space<smem>>
    %c67 = arith.constant 67 : index
    %34 = memref.load %arg1[%c67] : memref<97xf32, #tpu.memory_space<smem>>
    %35 = vector.broadcast %32 : f32 to vector<2x128xf32>
    %36 = arith.mulf %35, %0 : vector<2x128xf32>
    %37 = vector.broadcast %33 : f32 to vector<2x128xf32>
    %38 = arith.addf %36, %37 : vector<2x128xf32>
    %39 = math.tanh %38 : vector<2x128xf32>
    %40 = vector.broadcast %34 : f32 to vector<2x128xf32>
    %41 = arith.mulf %40, %39 : vector<2x128xf32>
    %42 = arith.addf %20, %41 : vector<2x128xf32>
    %c4 = arith.constant 4 : index
    %43 = memref.load %arg1[%c4] : memref<97xf32, #tpu.memory_space<smem>>
    %c36 = arith.constant 36 : index
    %44 = memref.load %arg1[%c36] : memref<97xf32, #tpu.memory_space<smem>>
    %c68 = arith.constant 68 : index
    %45 = memref.load %arg1[%c68] : memref<97xf32, #tpu.memory_space<smem>>
    %46 = vector.broadcast %43 : f32 to vector<2x128xf32>
    %47 = arith.mulf %46, %0 : vector<2x128xf32>
    %48 = vector.broadcast %44 : f32 to vector<2x128xf32>
    %49 = arith.addf %47, %48 : vector<2x128xf32>
    %50 = math.tanh %49 : vector<2x128xf32>
    %51 = vector.broadcast %45 : f32 to vector<2x128xf32>
    %52 = arith.mulf %51, %50 : vector<2x128xf32>
    %53 = arith.addf %31, %52 : vector<2x128xf32>
    %c5 = arith.constant 5 : index
    %54 = memref.load %arg1[%c5] : memref<97xf32, #tpu.memory_space<smem>>
    %c37 = arith.constant 37 : index
    %55 = memref.load %arg1[%c37] : memref<97xf32, #tpu.memory_space<smem>>
    %c69 = arith.constant 69 : index
    %56 = memref.load %arg1[%c69] : memref<97xf32, #tpu.memory_space<smem>>
    %57 = vector.broadcast %54 : f32 to vector<2x128xf32>
    %58 = arith.mulf %57, %0 : vector<2x128xf32>
    %59 = vector.broadcast %55 : f32 to vector<2x128xf32>
    %60 = arith.addf %58, %59 : vector<2x128xf32>
    %61 = math.tanh %60 : vector<2x128xf32>
    %62 = vector.broadcast %56 : f32 to vector<2x128xf32>
    %63 = arith.mulf %62, %61 : vector<2x128xf32>
    %64 = arith.addf %42, %63 : vector<2x128xf32>
    %c6 = arith.constant 6 : index
    %65 = memref.load %arg1[%c6] : memref<97xf32, #tpu.memory_space<smem>>
    %c38 = arith.constant 38 : index
    %66 = memref.load %arg1[%c38] : memref<97xf32, #tpu.memory_space<smem>>
    %c70 = arith.constant 70 : index
    %67 = memref.load %arg1[%c70] : memref<97xf32, #tpu.memory_space<smem>>
    %68 = vector.broadcast %65 : f32 to vector<2x128xf32>
    %69 = arith.mulf %68, %0 : vector<2x128xf32>
    %70 = vector.broadcast %66 : f32 to vector<2x128xf32>
    %71 = arith.addf %69, %70 : vector<2x128xf32>
    %72 = math.tanh %71 : vector<2x128xf32>
    %73 = vector.broadcast %67 : f32 to vector<2x128xf32>
    %74 = arith.mulf %73, %72 : vector<2x128xf32>
    %75 = arith.addf %53, %74 : vector<2x128xf32>
    %c7 = arith.constant 7 : index
    %76 = memref.load %arg1[%c7] : memref<97xf32, #tpu.memory_space<smem>>
    %c39 = arith.constant 39 : index
    %77 = memref.load %arg1[%c39] : memref<97xf32, #tpu.memory_space<smem>>
    %c71 = arith.constant 71 : index
    %78 = memref.load %arg1[%c71] : memref<97xf32, #tpu.memory_space<smem>>
    %79 = vector.broadcast %76 : f32 to vector<2x128xf32>
    %80 = arith.mulf %79, %0 : vector<2x128xf32>
    %81 = vector.broadcast %77 : f32 to vector<2x128xf32>
    %82 = arith.addf %80, %81 : vector<2x128xf32>
    %83 = math.tanh %82 : vector<2x128xf32>
    %84 = vector.broadcast %78 : f32 to vector<2x128xf32>
    %85 = arith.mulf %84, %83 : vector<2x128xf32>
    %86 = arith.addf %64, %85 : vector<2x128xf32>
    %c8 = arith.constant 8 : index
    %87 = memref.load %arg1[%c8] : memref<97xf32, #tpu.memory_space<smem>>
    %c40 = arith.constant 40 : index
    %88 = memref.load %arg1[%c40] : memref<97xf32, #tpu.memory_space<smem>>
    %c72 = arith.constant 72 : index
    %89 = memref.load %arg1[%c72] : memref<97xf32, #tpu.memory_space<smem>>
    %90 = vector.broadcast %87 : f32 to vector<2x128xf32>
    %91 = arith.mulf %90, %0 : vector<2x128xf32>
    %92 = vector.broadcast %88 : f32 to vector<2x128xf32>
    %93 = arith.addf %91, %92 : vector<2x128xf32>
    %94 = math.tanh %93 : vector<2x128xf32>
    %95 = vector.broadcast %89 : f32 to vector<2x128xf32>
    %96 = arith.mulf %95, %94 : vector<2x128xf32>
    %97 = arith.addf %75, %96 : vector<2x128xf32>
    %c9 = arith.constant 9 : index
    %98 = memref.load %arg1[%c9] : memref<97xf32, #tpu.memory_space<smem>>
    %c41 = arith.constant 41 : index
    %99 = memref.load %arg1[%c41] : memref<97xf32, #tpu.memory_space<smem>>
    %c73 = arith.constant 73 : index
    %100 = memref.load %arg1[%c73] : memref<97xf32, #tpu.memory_space<smem>>
    %101 = vector.broadcast %98 : f32 to vector<2x128xf32>
    %102 = arith.mulf %101, %0 : vector<2x128xf32>
    %103 = vector.broadcast %99 : f32 to vector<2x128xf32>
    %104 = arith.addf %102, %103 : vector<2x128xf32>
    %105 = math.tanh %104 : vector<2x128xf32>
    %106 = vector.broadcast %100 : f32 to vector<2x128xf32>
    %107 = arith.mulf %106, %105 : vector<2x128xf32>
    %108 = arith.addf %86, %107 : vector<2x128xf32>
    %c10 = arith.constant 10 : index
    %109 = memref.load %arg1[%c10] : memref<97xf32, #tpu.memory_space<smem>>
    %c42 = arith.constant 42 : index
    %110 = memref.load %arg1[%c42] : memref<97xf32, #tpu.memory_space<smem>>
    %c74 = arith.constant 74 : index
    %111 = memref.load %arg1[%c74] : memref<97xf32, #tpu.memory_space<smem>>
    %112 = vector.broadcast %109 : f32 to vector<2x128xf32>
    %113 = arith.mulf %112, %0 : vector<2x128xf32>
    %114 = vector.broadcast %110 : f32 to vector<2x128xf32>
    %115 = arith.addf %113, %114 : vector<2x128xf32>
    %116 = math.tanh %115 : vector<2x128xf32>
    %117 = vector.broadcast %111 : f32 to vector<2x128xf32>
    %118 = arith.mulf %117, %116 : vector<2x128xf32>
    %119 = arith.addf %97, %118 : vector<2x128xf32>
    %c11 = arith.constant 11 : index
    %120 = memref.load %arg1[%c11] : memref<97xf32, #tpu.memory_space<smem>>
    %c43 = arith.constant 43 : index
    %121 = memref.load %arg1[%c43] : memref<97xf32, #tpu.memory_space<smem>>
    %c75 = arith.constant 75 : index
    %122 = memref.load %arg1[%c75] : memref<97xf32, #tpu.memory_space<smem>>
    %123 = vector.broadcast %120 : f32 to vector<2x128xf32>
    %124 = arith.mulf %123, %0 : vector<2x128xf32>
    %125 = vector.broadcast %121 : f32 to vector<2x128xf32>
    %126 = arith.addf %124, %125 : vector<2x128xf32>
    %127 = math.tanh %126 : vector<2x128xf32>
    %128 = vector.broadcast %122 : f32 to vector<2x128xf32>
    %129 = arith.mulf %128, %127 : vector<2x128xf32>
    %130 = arith.addf %108, %129 : vector<2x128xf32>
    %c12 = arith.constant 12 : index
    %131 = memref.load %arg1[%c12] : memref<97xf32, #tpu.memory_space<smem>>
    %c44 = arith.constant 44 : index
    %132 = memref.load %arg1[%c44] : memref<97xf32, #tpu.memory_space<smem>>
    %c76 = arith.constant 76 : index
    %133 = memref.load %arg1[%c76] : memref<97xf32, #tpu.memory_space<smem>>
    %134 = vector.broadcast %131 : f32 to vector<2x128xf32>
    %135 = arith.mulf %134, %0 : vector<2x128xf32>
    %136 = vector.broadcast %132 : f32 to vector<2x128xf32>
    %137 = arith.addf %135, %136 : vector<2x128xf32>
    %138 = math.tanh %137 : vector<2x128xf32>
    %139 = vector.broadcast %133 : f32 to vector<2x128xf32>
    %140 = arith.mulf %139, %138 : vector<2x128xf32>
    %141 = arith.addf %119, %140 : vector<2x128xf32>
    %c13 = arith.constant 13 : index
    %142 = memref.load %arg1[%c13] : memref<97xf32, #tpu.memory_space<smem>>
    %c45 = arith.constant 45 : index
    %143 = memref.load %arg1[%c45] : memref<97xf32, #tpu.memory_space<smem>>
    %c77 = arith.constant 77 : index
    %144 = memref.load %arg1[%c77] : memref<97xf32, #tpu.memory_space<smem>>
    %145 = vector.broadcast %142 : f32 to vector<2x128xf32>
    %146 = arith.mulf %145, %0 : vector<2x128xf32>
    %147 = vector.broadcast %143 : f32 to vector<2x128xf32>
    %148 = arith.addf %146, %147 : vector<2x128xf32>
    %149 = math.tanh %148 : vector<2x128xf32>
    %150 = vector.broadcast %144 : f32 to vector<2x128xf32>
    %151 = arith.mulf %150, %149 : vector<2x128xf32>
    %152 = arith.addf %130, %151 : vector<2x128xf32>
    %c14 = arith.constant 14 : index
    %153 = memref.load %arg1[%c14] : memref<97xf32, #tpu.memory_space<smem>>
    %c46 = arith.constant 46 : index
    %154 = memref.load %arg1[%c46] : memref<97xf32, #tpu.memory_space<smem>>
    %c78 = arith.constant 78 : index
    %155 = memref.load %arg1[%c78] : memref<97xf32, #tpu.memory_space<smem>>
    %156 = vector.broadcast %153 : f32 to vector<2x128xf32>
    %157 = arith.mulf %156, %0 : vector<2x128xf32>
    %158 = vector.broadcast %154 : f32 to vector<2x128xf32>
    %159 = arith.addf %157, %158 : vector<2x128xf32>
    %160 = math.tanh %159 : vector<2x128xf32>
    %161 = vector.broadcast %155 : f32 to vector<2x128xf32>
    %162 = arith.mulf %161, %160 : vector<2x128xf32>
    %163 = arith.addf %141, %162 : vector<2x128xf32>
    %c15 = arith.constant 15 : index
    %164 = memref.load %arg1[%c15] : memref<97xf32, #tpu.memory_space<smem>>
    %c47 = arith.constant 47 : index
    %165 = memref.load %arg1[%c47] : memref<97xf32, #tpu.memory_space<smem>>
    %c79 = arith.constant 79 : index
    %166 = memref.load %arg1[%c79] : memref<97xf32, #tpu.memory_space<smem>>
    %167 = vector.broadcast %164 : f32 to vector<2x128xf32>
    %168 = arith.mulf %167, %0 : vector<2x128xf32>
    %169 = vector.broadcast %165 : f32 to vector<2x128xf32>
    %170 = arith.addf %168, %169 : vector<2x128xf32>
    %171 = math.tanh %170 : vector<2x128xf32>
    %172 = vector.broadcast %166 : f32 to vector<2x128xf32>
    %173 = arith.mulf %172, %171 : vector<2x128xf32>
    %174 = arith.addf %152, %173 : vector<2x128xf32>
    %c16 = arith.constant 16 : index
    %175 = memref.load %arg1[%c16] : memref<97xf32, #tpu.memory_space<smem>>
    %c48 = arith.constant 48 : index
    %176 = memref.load %arg1[%c48] : memref<97xf32, #tpu.memory_space<smem>>
    %c80 = arith.constant 80 : index
    %177 = memref.load %arg1[%c80] : memref<97xf32, #tpu.memory_space<smem>>
    %178 = vector.broadcast %175 : f32 to vector<2x128xf32>
    %179 = arith.mulf %178, %0 : vector<2x128xf32>
    %180 = vector.broadcast %176 : f32 to vector<2x128xf32>
    %181 = arith.addf %179, %180 : vector<2x128xf32>
    %182 = math.tanh %181 : vector<2x128xf32>
    %183 = vector.broadcast %177 : f32 to vector<2x128xf32>
    %184 = arith.mulf %183, %182 : vector<2x128xf32>
    %185 = arith.addf %163, %184 : vector<2x128xf32>
    %c17 = arith.constant 17 : index
    %186 = memref.load %arg1[%c17] : memref<97xf32, #tpu.memory_space<smem>>
    %c49 = arith.constant 49 : index
    %187 = memref.load %arg1[%c49] : memref<97xf32, #tpu.memory_space<smem>>
    %c81 = arith.constant 81 : index
    %188 = memref.load %arg1[%c81] : memref<97xf32, #tpu.memory_space<smem>>
    %189 = vector.broadcast %186 : f32 to vector<2x128xf32>
    %190 = arith.mulf %189, %0 : vector<2x128xf32>
    %191 = vector.broadcast %187 : f32 to vector<2x128xf32>
    %192 = arith.addf %190, %191 : vector<2x128xf32>
    %193 = math.tanh %192 : vector<2x128xf32>
    %194 = vector.broadcast %188 : f32 to vector<2x128xf32>
    %195 = arith.mulf %194, %193 : vector<2x128xf32>
    %196 = arith.addf %174, %195 : vector<2x128xf32>
    %c18 = arith.constant 18 : index
    %197 = memref.load %arg1[%c18] : memref<97xf32, #tpu.memory_space<smem>>
    %c50 = arith.constant 50 : index
    %198 = memref.load %arg1[%c50] : memref<97xf32, #tpu.memory_space<smem>>
    %c82 = arith.constant 82 : index
    %199 = memref.load %arg1[%c82] : memref<97xf32, #tpu.memory_space<smem>>
    %200 = vector.broadcast %197 : f32 to vector<2x128xf32>
    %201 = arith.mulf %200, %0 : vector<2x128xf32>
    %202 = vector.broadcast %198 : f32 to vector<2x128xf32>
    %203 = arith.addf %201, %202 : vector<2x128xf32>
    %204 = math.tanh %203 : vector<2x128xf32>
    %205 = vector.broadcast %199 : f32 to vector<2x128xf32>
    %206 = arith.mulf %205, %204 : vector<2x128xf32>
    %207 = arith.addf %185, %206 : vector<2x128xf32>
    %c19 = arith.constant 19 : index
    %208 = memref.load %arg1[%c19] : memref<97xf32, #tpu.memory_space<smem>>
    %c51 = arith.constant 51 : index
    %209 = memref.load %arg1[%c51] : memref<97xf32, #tpu.memory_space<smem>>
    %c83 = arith.constant 83 : index
    %210 = memref.load %arg1[%c83] : memref<97xf32, #tpu.memory_space<smem>>
    %211 = vector.broadcast %208 : f32 to vector<2x128xf32>
    %212 = arith.mulf %211, %0 : vector<2x128xf32>
    %213 = vector.broadcast %209 : f32 to vector<2x128xf32>
    %214 = arith.addf %212, %213 : vector<2x128xf32>
    %215 = math.tanh %214 : vector<2x128xf32>
    %216 = vector.broadcast %210 : f32 to vector<2x128xf32>
    %217 = arith.mulf %216, %215 : vector<2x128xf32>
    %218 = arith.addf %196, %217 : vector<2x128xf32>
    %c20 = arith.constant 20 : index
    %219 = memref.load %arg1[%c20] : memref<97xf32, #tpu.memory_space<smem>>
    %c52 = arith.constant 52 : index
    %220 = memref.load %arg1[%c52] : memref<97xf32, #tpu.memory_space<smem>>
    %c84 = arith.constant 84 : index
    %221 = memref.load %arg1[%c84] : memref<97xf32, #tpu.memory_space<smem>>
    %222 = vector.broadcast %219 : f32 to vector<2x128xf32>
    %223 = arith.mulf %222, %0 : vector<2x128xf32>
    %224 = vector.broadcast %220 : f32 to vector<2x128xf32>
    %225 = arith.addf %223, %224 : vector<2x128xf32>
    %226 = math.tanh %225 : vector<2x128xf32>
    %227 = vector.broadcast %221 : f32 to vector<2x128xf32>
    %228 = arith.mulf %227, %226 : vector<2x128xf32>
    %229 = arith.addf %207, %228 : vector<2x128xf32>
    %c21 = arith.constant 21 : index
    %230 = memref.load %arg1[%c21] : memref<97xf32, #tpu.memory_space<smem>>
    %c53 = arith.constant 53 : index
    %231 = memref.load %arg1[%c53] : memref<97xf32, #tpu.memory_space<smem>>
    %c85 = arith.constant 85 : index
    %232 = memref.load %arg1[%c85] : memref<97xf32, #tpu.memory_space<smem>>
    %233 = vector.broadcast %230 : f32 to vector<2x128xf32>
    %234 = arith.mulf %233, %0 : vector<2x128xf32>
    %235 = vector.broadcast %231 : f32 to vector<2x128xf32>
    %236 = arith.addf %234, %235 : vector<2x128xf32>
    %237 = math.tanh %236 : vector<2x128xf32>
    %238 = vector.broadcast %232 : f32 to vector<2x128xf32>
    %239 = arith.mulf %238, %237 : vector<2x128xf32>
    %240 = arith.addf %218, %239 : vector<2x128xf32>
    %c22 = arith.constant 22 : index
    %241 = memref.load %arg1[%c22] : memref<97xf32, #tpu.memory_space<smem>>
    %c54 = arith.constant 54 : index
    %242 = memref.load %arg1[%c54] : memref<97xf32, #tpu.memory_space<smem>>
    %c86 = arith.constant 86 : index
    %243 = memref.load %arg1[%c86] : memref<97xf32, #tpu.memory_space<smem>>
    %244 = vector.broadcast %241 : f32 to vector<2x128xf32>
    %245 = arith.mulf %244, %0 : vector<2x128xf32>
    %246 = vector.broadcast %242 : f32 to vector<2x128xf32>
    %247 = arith.addf %245, %246 : vector<2x128xf32>
    %248 = math.tanh %247 : vector<2x128xf32>
    %249 = vector.broadcast %243 : f32 to vector<2x128xf32>
    %250 = arith.mulf %249, %248 : vector<2x128xf32>
    %251 = arith.addf %229, %250 : vector<2x128xf32>
    %c23 = arith.constant 23 : index
    %252 = memref.load %arg1[%c23] : memref<97xf32, #tpu.memory_space<smem>>
    %c55 = arith.constant 55 : index
    %253 = memref.load %arg1[%c55] : memref<97xf32, #tpu.memory_space<smem>>
    %c87 = arith.constant 87 : index
    %254 = memref.load %arg1[%c87] : memref<97xf32, #tpu.memory_space<smem>>
    %255 = vector.broadcast %252 : f32 to vector<2x128xf32>
    %256 = arith.mulf %255, %0 : vector<2x128xf32>
    %257 = vector.broadcast %253 : f32 to vector<2x128xf32>
    %258 = arith.addf %256, %257 : vector<2x128xf32>
    %259 = math.tanh %258 : vector<2x128xf32>
    %260 = vector.broadcast %254 : f32 to vector<2x128xf32>
    %261 = arith.mulf %260, %259 : vector<2x128xf32>
    %262 = arith.addf %240, %261 : vector<2x128xf32>
    %c24 = arith.constant 24 : index
    %263 = memref.load %arg1[%c24] : memref<97xf32, #tpu.memory_space<smem>>
    %c56 = arith.constant 56 : index
    %264 = memref.load %arg1[%c56] : memref<97xf32, #tpu.memory_space<smem>>
    %c88 = arith.constant 88 : index
    %265 = memref.load %arg1[%c88] : memref<97xf32, #tpu.memory_space<smem>>
    %266 = vector.broadcast %263 : f32 to vector<2x128xf32>
    %267 = arith.mulf %266, %0 : vector<2x128xf32>
    %268 = vector.broadcast %264 : f32 to vector<2x128xf32>
    %269 = arith.addf %267, %268 : vector<2x128xf32>
    %270 = math.tanh %269 : vector<2x128xf32>
    %271 = vector.broadcast %265 : f32 to vector<2x128xf32>
    %272 = arith.mulf %271, %270 : vector<2x128xf32>
    %273 = arith.addf %251, %272 : vector<2x128xf32>
    %c25 = arith.constant 25 : index
    %274 = memref.load %arg1[%c25] : memref<97xf32, #tpu.memory_space<smem>>
    %c57 = arith.constant 57 : index
    %275 = memref.load %arg1[%c57] : memref<97xf32, #tpu.memory_space<smem>>
    %c89 = arith.constant 89 : index
    %276 = memref.load %arg1[%c89] : memref<97xf32, #tpu.memory_space<smem>>
    %277 = vector.broadcast %274 : f32 to vector<2x128xf32>
    %278 = arith.mulf %277, %0 : vector<2x128xf32>
    %279 = vector.broadcast %275 : f32 to vector<2x128xf32>
    %280 = arith.addf %278, %279 : vector<2x128xf32>
    %281 = math.tanh %280 : vector<2x128xf32>
    %282 = vector.broadcast %276 : f32 to vector<2x128xf32>
    %283 = arith.mulf %282, %281 : vector<2x128xf32>
    %284 = arith.addf %262, %283 : vector<2x128xf32>
    %c26 = arith.constant 26 : index
    %285 = memref.load %arg1[%c26] : memref<97xf32, #tpu.memory_space<smem>>
    %c58 = arith.constant 58 : index
    %286 = memref.load %arg1[%c58] : memref<97xf32, #tpu.memory_space<smem>>
    %c90 = arith.constant 90 : index
    %287 = memref.load %arg1[%c90] : memref<97xf32, #tpu.memory_space<smem>>
    %288 = vector.broadcast %285 : f32 to vector<2x128xf32>
    %289 = arith.mulf %288, %0 : vector<2x128xf32>
    %290 = vector.broadcast %286 : f32 to vector<2x128xf32>
    %291 = arith.addf %289, %290 : vector<2x128xf32>
    %292 = math.tanh %291 : vector<2x128xf32>
    %293 = vector.broadcast %287 : f32 to vector<2x128xf32>
    %294 = arith.mulf %293, %292 : vector<2x128xf32>
    %295 = arith.addf %273, %294 : vector<2x128xf32>
    %c27 = arith.constant 27 : index
    %296 = memref.load %arg1[%c27] : memref<97xf32, #tpu.memory_space<smem>>
    %c59 = arith.constant 59 : index
    %297 = memref.load %arg1[%c59] : memref<97xf32, #tpu.memory_space<smem>>
    %c91 = arith.constant 91 : index
    %298 = memref.load %arg1[%c91] : memref<97xf32, #tpu.memory_space<smem>>
    %299 = vector.broadcast %296 : f32 to vector<2x128xf32>
    %300 = arith.mulf %299, %0 : vector<2x128xf32>
    %301 = vector.broadcast %297 : f32 to vector<2x128xf32>
    %302 = arith.addf %300, %301 : vector<2x128xf32>
    %303 = math.tanh %302 : vector<2x128xf32>
    %304 = vector.broadcast %298 : f32 to vector<2x128xf32>
    %305 = arith.mulf %304, %303 : vector<2x128xf32>
    %306 = arith.addf %284, %305 : vector<2x128xf32>
    %c28 = arith.constant 28 : index
    %307 = memref.load %arg1[%c28] : memref<97xf32, #tpu.memory_space<smem>>
    %c60 = arith.constant 60 : index
    %308 = memref.load %arg1[%c60] : memref<97xf32, #tpu.memory_space<smem>>
    %c92 = arith.constant 92 : index
    %309 = memref.load %arg1[%c92] : memref<97xf32, #tpu.memory_space<smem>>
    %310 = vector.broadcast %307 : f32 to vector<2x128xf32>
    %311 = arith.mulf %310, %0 : vector<2x128xf32>
    %312 = vector.broadcast %308 : f32 to vector<2x128xf32>
    %313 = arith.addf %311, %312 : vector<2x128xf32>
    %314 = math.tanh %313 : vector<2x128xf32>
    %315 = vector.broadcast %309 : f32 to vector<2x128xf32>
    %316 = arith.mulf %315, %314 : vector<2x128xf32>
    %317 = arith.addf %295, %316 : vector<2x128xf32>
    %c29 = arith.constant 29 : index
    %318 = memref.load %arg1[%c29] : memref<97xf32, #tpu.memory_space<smem>>
    %c61 = arith.constant 61 : index
    %319 = memref.load %arg1[%c61] : memref<97xf32, #tpu.memory_space<smem>>
    %c93 = arith.constant 93 : index
    %320 = memref.load %arg1[%c93] : memref<97xf32, #tpu.memory_space<smem>>
    %321 = vector.broadcast %318 : f32 to vector<2x128xf32>
    %322 = arith.mulf %321, %0 : vector<2x128xf32>
    %323 = vector.broadcast %319 : f32 to vector<2x128xf32>
    %324 = arith.addf %322, %323 : vector<2x128xf32>
    %325 = math.tanh %324 : vector<2x128xf32>
    %326 = vector.broadcast %320 : f32 to vector<2x128xf32>
    %327 = arith.mulf %326, %325 : vector<2x128xf32>
    %328 = arith.addf %306, %327 : vector<2x128xf32>
    %c30 = arith.constant 30 : index
    %329 = memref.load %arg1[%c30] : memref<97xf32, #tpu.memory_space<smem>>
    %c62 = arith.constant 62 : index
    %330 = memref.load %arg1[%c62] : memref<97xf32, #tpu.memory_space<smem>>
    %c94 = arith.constant 94 : index
    %331 = memref.load %arg1[%c94] : memref<97xf32, #tpu.memory_space<smem>>
    %332 = vector.broadcast %329 : f32 to vector<2x128xf32>
    %333 = arith.mulf %332, %0 : vector<2x128xf32>
    %334 = vector.broadcast %330 : f32 to vector<2x128xf32>
    %335 = arith.addf %333, %334 : vector<2x128xf32>
    %336 = math.tanh %335 : vector<2x128xf32>
    %337 = vector.broadcast %331 : f32 to vector<2x128xf32>
    %338 = arith.mulf %337, %336 : vector<2x128xf32>
    %339 = arith.addf %317, %338 : vector<2x128xf32>
    %c31 = arith.constant 31 : index
    %340 = memref.load %arg1[%c31] : memref<97xf32, #tpu.memory_space<smem>>
    %c63 = arith.constant 63 : index
    %341 = memref.load %arg1[%c63] : memref<97xf32, #tpu.memory_space<smem>>
    %c95 = arith.constant 95 : index
    %342 = memref.load %arg1[%c95] : memref<97xf32, #tpu.memory_space<smem>>
    %343 = vector.broadcast %340 : f32 to vector<2x128xf32>
    %344 = arith.mulf %343, %0 : vector<2x128xf32>
    %345 = vector.broadcast %341 : f32 to vector<2x128xf32>
    %346 = arith.addf %344, %345 : vector<2x128xf32>
    %347 = math.tanh %346 : vector<2x128xf32>
    %348 = vector.broadcast %342 : f32 to vector<2x128xf32>
    %349 = arith.mulf %348, %347 : vector<2x128xf32>
    %350 = arith.addf %328, %349 : vector<2x128xf32>
    %351 = arith.addf %339, %350 : vector<2x128xf32>
    %c96 = arith.constant 96 : index
    %352 = memref.load %arg1[%c96] : memref<97xf32, #tpu.memory_space<smem>>
    %353 = vector.broadcast %352 : f32 to vector<2x128xf32>
    %354 = arith.addf %351, %353 : vector<2x128xf32>
    %355 = arith.negf %354 : vector<2x128xf32>
    %356 = math.exp %355 : vector<2x128xf32>
    %cst = arith.constant 1.000000e+00 : f32
    %357 = vector.broadcast %cst : f32 to vector<2x128xf32>
    %358 = arith.addf %357, %356 : vector<2x128xf32>
    %359 = arith.divf %357, %358 : vector<2x128xf32>
    %c0_2 = arith.constant 0 : index
    %c0_3 = arith.constant 0 : index
    %360 = vector.load %arg3[%c0_2, %c0_3] : memref<2x128xf32, #tpu.memory_space<vmem>>, vector<2x128xf32>
    tpu.vector_store %arg3[%c0_2, %c0_3], %359 {strides = array<i32>} : memref<2x128xf32, #tpu.memory_space<vmem>>, vector<2x128xf32>,
    return
  }
  func.func @transform_0(%arg0: i32) -> i32 {
    %c0_i32 = arith.constant 0 : i32
    %c0_i32_0 = arith.constant 0 : i32
    return %c0_i32 : i32
  }
  func.func @transform_1(%arg0: i32) -> (i32, i32) {
    %c0_i32 = arith.constant 0 : i32
    %c0_i32_0 = arith.constant 0 : i32
    return %arg0, %c0_i32 : i32, i32
  }
  func.func @transform_2(%arg0: i32) -> (i32, i32) {
    %c0_i32 = arith.constant 0 : i32
    %c0_i32_0 = arith.constant 0 : i32
    return %arg0, %c0_i32 : i32, i32
  }
}

</mosaic_0001>

<llo_original>
// kernel: tpu_custom_call.1
$region0: #{tpu_custom_call.1}
  #allocation0 [shape = 'u32[]', space=smem, size = 0x4, offset = 0x4, fixed_abs, tag = 'smem constant byte address 0x4 - core index']
  #allocation1 [shape = 'u32[144,128]{1,0:T(1,128)}', space=vmem, size = 0x12000, scoped, tag = 'internal scratch']
  %s0 = inlined_call_operand.hbm [shape: f32[97], index: 0, kind: input, shape index: {}]
  %s1 = inlined_call_operand.vmem [shape: f32[2,128], index: 1, kind: input, shape index: {}]
  %s2 = inlined_call_operand.hbm [shape: f32[2,128], index: 2, kind: output, shape index: {}]
  %s3 = sld [smem:[#allocation0]]
  $region22: #{tpu_custom_call.1} parent=0
    _
  %s5 = ssub.s32 1, %s3
  %s6 = scalar_select 0, %s5, %s3
  $region1: #{tpu_custom_call.1} parent=0
    #allocation2 [shape = 'u8[512]{0}', space=smem, size = 0x200, scoped, tag = 'input window, operand 0, single buffered']
    #allocation3 [shape = 's32[1]{0}', space=sflag, size = 0x4, scoped, tag = 'scoped memory for tpu_custom_call.1']
    #allocation4 [shape = 's32[1]{0}', space=sflag, size = 0x4, scoped, tag = 'scoped memory for tpu_custom_call.1']
    #allocation5 [shape = 'u8[1024]{0}', space=vmem, size = 0x400, scoped, tag = 'output window, operand 0, single buffered']
    %7 = vsyncpa [#allocation4], 0
    %8 = vsyncpa [#allocation3], 0
    // Predicated region
    $region2: #{tpu_custom_call.1} parent=1 // pred_check
      _
    $region3: #{tpu_custom_call.1} parent=1 // pred_check_branch
      %10 = sbr.rel (0) target = $region5
    $region4: #{tpu_custom_call.1} parent=1 // pred_region
      %s12 = ssub.s32 16, 16
      %13 = vsyncadd [#allocation4], %s12
      %16 = dma.hbm_to_smem %s0, 16, [#allocation2], [#allocation4]
    $region5: #{tpu_custom_call.1} parent=1 // pred_fallthru
      _
    // Predicated region
    $region6: #{tpu_custom_call.1} parent=1 // pred_check
      _
    $region7: #{tpu_custom_call.1} parent=1 // pred_check_branch
      %18 = sbr.rel (0) target = $region9
    $region8: #{tpu_custom_call.1} parent=1 // pred_region
      _
    $region9: #{tpu_custom_call.1} parent=1 // pred_fallthru
      _
    // Predicated region
    $region10: #{tpu_custom_call.1} parent=1 // pred_check
      _
    $region11: #{tpu_custom_call.1} parent=1 // pred_check_branch
      %20 = sbr.rel (0) target = $region13
    $region12: #{tpu_custom_call.1} parent=1 // pred_region
      %21 = dma.done [#allocation4], 16
    $region13: #{tpu_custom_call.1} parent=1 // pred_fallthru
      _
    %22 = sfence
    %v23 = vld [vmem:[%s1] sm:$0x3]
    %s24 = sld [smem:[#allocation2]]
    %s25 = sld [smem:[#allocation2 + $0x20]]
    %s26 = sld [smem:[#allocation2 + $0x40]]
    %v27 = vstv %s24
    %v28 = vmul.f32 %v27, %v23
    %v29 = vstv %s25
    %v30 = vadd.f32 %v28, %v29
    %v31 = vtanh.pop %v30
    %v32 = vstv %s26
    %v33 = vmul.f32 %v32, %v31
    %s34 = sld [smem:[#allocation2 + $0x1]]
    %s35 = sld [smem:[#allocation2 + $0x21]]
    %s36 = sld [smem:[#allocation2 + $0x41]]
    %v37 = vstv %s34
    %v38 = vmul.f32 %v37, %v23
    %v39 = vstv %s35
    %v40 = vadd.f32 %v38, %v39
    %v41 = vtanh.pop %v40
    %v42 = vstv %s36
    %v43 = vmul.f32 %v42, %v41
    %s44 = sld [smem:[#allocation2 + $0x2]]
    %s45 = sld [smem:[#allocation2 + $0x22]]
    %s46 = sld [smem:[#allocation2 + $0x42]]
    %v47 = vstv %s44
    %v48 = vmul.f32 %v47, %v23
    %v49 = vstv %s45
    %v50 = vadd.f32 %v48, %v49
    %v51 = vtanh.pop %v50
    %v52 = vstv %s46
    %v53 = vmul.f32 %v52, %v51
    %v54 = vadd.f32 %v33, %v53
    %s55 = sld [smem:[#allocation2 + $0x3]]
    %s56 = sld [smem:[#allocation2 + $0x23]]
    %s57 = sld [smem:[#allocation2 + $0x43]]
    %v58 = vstv %s55
    %v59 = vmul.f32 %v58, %v23
    %v60 = vstv %s56
    %v61 = vadd.f32 %v59, %v60
    %v62 = vtanh.pop %v61
    %v63 = vstv %s57
    %v64 = vmul.f32 %v63, %v62
    %v65 = vadd.f32 %v43, %v64
    %s66 = sld [smem:[#allocation2 + $0x4]]
    %s67 = sld [smem:[#allocation2 + $0x24]]
    %s68 = sld [smem:[#allocation2 + $0x44]]
    %v69 = vstv %s66
    %v70 = vmul.f32 %v69, %v23
    %v71 = vstv %s67
    %v72 = vadd.f32 %v70, %v71
    %v73 = vtanh.pop %v72
    %v74 = vstv %s68
    %v75 = vmul.f32 %v74, %v73
    %v76 = vadd.f32 %v54, %v75
    %s77 = sld [smem:[#allocation2 + $0x5]]
    %s78 = sld [smem:[#allocation2 + $0x25]]
    %s79 = sld [smem:[#allocation2 + $0x45]]
    %v80 = vstv %s77
    %v81 = vmul.f32 %v80, %v23
    %v82 = vstv %s78
    %v83 = vadd.f32 %v81, %v82
    %v84 = vtanh.pop %v83
    %v85 = vstv %s79
    %v86 = vmul.f32 %v85, %v84
    %v87 = vadd.f32 %v65, %v86
    %s88 = sld [smem:[#allocation2 + $0x6]]
    %s89 = sld [smem:[#allocation2 + $0x26]]
    %s90 = sld [smem:[#allocation2 + $0x46]]
    %v91 = vstv %s88
    %v92 = vmul.f32 %v91, %v23
    %v93 = vstv %s89
    %v94 = vadd.f32 %v92, %v93
    %v95 = vtanh.pop %v94
    %v96 = vstv %s90
    %v97 = vmul.f32 %v96, %v95
    %v98 = vadd.f32 %v76, %v97
    %s99 = sld [smem:[#allocation2 + $0x7]]
    %s100 = sld [smem:[#allocation2 + $0x27]]
    %s101 = sld [smem:[#allocation2 + $0x47]]
    %v102 = vstv %s99
    %v103 = vmul.f32 %v102, %v23
    %v104 = vstv %s100
    %v105 = vadd.f32 %v103, %v104
    %v106 = vtanh.pop %v105
    %v107 = vstv %s101
    %v108 = vmul.f32 %v107, %v106
    %v109 = vadd.f32 %v87, %v108
    %s110 = sld [smem:[#allocation2 + $0x8]]
    %s111 = sld [smem:[#allocation2 + $0x28]]
    %s112 = sld [smem:[#allocation2 + $0x48]]
    %v113 = vstv %s110
    %v114 = vmul.f32 %v113, %v23
    %v115 = vstv %s111
    %v116 = vadd.f32 %v114, %v115
    %v117 = vtanh.pop %v116
    %v118 = vstv %s112
    %v119 = vmul.f32 %v118, %v117
    %v120 = vadd.f32 %v98, %v119
    %s121 = sld [smem:[#allocation2 + $0x9]]
    %s122 = sld [smem:[#allocation2 + $0x29]]
    %s123 = sld [smem:[#allocation2 + $0x49]]
    %v124 = vstv %s121
    %v125 = vmul.f32 %v124, %v23
    %v126 = vstv %s122
    %v127 = vadd.f32 %v125, %v126
    %v128 = vtanh.pop %v127
    %v129 = vstv %s123
    %v130 = vmul.f32 %v129, %v128
    %v131 = vadd.f32 %v109, %v130
    %s132 = sld [smem:[#allocation2 + $0xa]]
    %s133 = sld [smem:[#allocation2 + $0x2a]]
    %s134 = sld [smem:[#allocation2 + $0x4a]]
    %v135 = vstv %s132
    %v136 = vmul.f32 %v135, %v23
    %v137 = vstv %s133
    %v138 = vadd.f32 %v136, %v137
    %v139 = vtanh.pop %v138
    %v140 = vstv %s134
    %v141 = vmul.f32 %v140, %v139
    %v142 = vadd.f32 %v120, %v141
    %s143 = sld [smem:[#allocation2 + $0xb]]
    %s144 = sld [smem:[#allocation2 + $0x2b]]
    %s145 = sld [smem:[#allocation2 + $0x4b]]
    %v146 = vstv %s143
    %v147 = vmul.f32 %v146, %v23
    %v148 = vstv %s144
    %v149 = vadd.f32 %v147, %v148
    %v150 = vtanh.pop %v149
    %v151 = vstv %s145
    %v152 = vmul.f32 %v151, %v150
    %v153 = vadd.f32 %v131, %v152
    %s154 = sld [smem:[#allocation2 + $0xc]]
    %s155 = sld [smem:[#allocation2 + $0x2c]]
    %s156 = sld [smem:[#allocation2 + $0x4c]]
    %v157 = vstv %s154
    %v158 = vmul.f32 %v157, %v23
    %v159 = vstv %s155
    %v160 = vadd.f32 %v158, %v159
    %v161 = vtanh.pop %v160
    %v162 = vstv %s156
    %v163 = vmul.f32 %v162, %v161
    %v164 = vadd.f32 %v142, %v163
    %s165 = sld [smem:[#allocation2 + $0xd]]
    %s166 = sld [smem:[#allocation2 + $0x2d]]
    %s167 = sld [smem:[#allocation2 + $0x4d]]
    %v168 = vstv %s165
    %v169 = vmul.f32 %v168, %v23
    %v170 = vstv %s166
    %v171 = vadd.f32 %v169, %v170
    %v172 = vtanh.pop %v171
    %v173 = vstv %s167
    %v174 = vmul.f32 %v173, %v172
    %v175 = vadd.f32 %v153, %v174
    %s176 = sld [smem:[#allocation2 + $0xe]]
    %s177 = sld [smem:[#allocation2 + $0x2e]]
    %s178 = sld [smem:[#allocation2 + $0x4e]]
    %v179 = vstv %s176
    %v180 = vmul.f32 %v179, %v23
    %v181 = vstv %s177
    %v182 = vadd.f32 %v180, %v181
    %v183 = vtanh.pop %v182
    %v184 = vstv %s178
    %v185 = vmul.f32 %v184, %v183
    %v186 = vadd.f32 %v164, %v185
    %s187 = sld [smem:[#allocation2 + $0xf]]
    %s188 = sld [smem:[#allocation2 + $0x2f]]
    %s189 = sld [smem:[#allocation2 + $0x4f]]
    %v190 = vstv %s187
    %v191 = vmul.f32 %v190, %v23
    %v192 = vstv %s188
    %v193 = vadd.f32 %v191, %v192
    %v194 = vtanh.pop %v193
    %v195 = vstv %s189
    %v196 = vmul.f32 %v195, %v194
    %v197 = vadd.f32 %v175, %v196
    %s198 = sld [smem:[#allocation2 + $0x10]]
    %s199 = sld [smem:[#allocation2 + $0x30]]
    %s200 = sld [smem:[#allocation2 + $0x50]]
    %v201 = vstv %s198
    %v202 = vmul.f32 %v201, %v23
    %v203 = vstv %s199
    %v204 = vadd.f32 %v202, %v203
    %v205 = vtanh.pop %v204
    %v206 = vstv %s200
    %v207 = vmul.f32 %v206, %v205
    %v208 = vadd.f32 %v186, %v207
    %s209 = sld [smem:[#allocation2 + $0x11]]
    %s210 = sld [smem:[#allocation2 + $0x31]]
    %s211 = sld [smem:[#allocation2 + $0x51]]
    %v212 = vstv %s209
    %v213 = vmul.f32 %v212, %v23
    %v214 = vstv %s210
    %v215 = vadd.f32 %v213, %v214
    %v216 = vtanh.pop %v215
    %v217 = vstv %s211
    %v218 = vmul.f32 %v217, %v216
    %v219 = vadd.f32 %v197, %v218
    %s220 = sld [smem:[#allocation2 + $0x12]]
    %s221 = sld [smem:[#allocation2 + $0x32]]
    %s222 = sld [smem:[#allocation2 + $0x52]]
    %v223 = vstv %s220
    %v224 = vmul.f32 %v223, %v23
    %v225 = vstv %s221
    %v226 = vadd.f32 %v224, %v225
    %v227 = vtanh.pop %v226
    %v228 = vstv %s222
    %v229 = vmul.f32 %v228, %v227
    %v230 = vadd.f32 %v208, %v229
    %s231 = sld [smem:[#allocation2 + $0x13]]
    %s232 = sld [smem:[#allocation2 + $0x33]]
    %s233 = sld [smem:[#allocation2 + $0x53]]
    %v234 = vstv %s231
    %v235 = vmul.f32 %v234, %v23
    %v236 = vstv %s232
    %v237 = vadd.f32 %v235, %v236
    %v238 = vtanh.pop %v237
    %v239 = vstv %s233
    %v240 = vmul.f32 %v239, %v238
    %v241 = vadd.f32 %v219, %v240
    %s242 = sld [smem:[#allocation2 + $0x14]]
    %s243 = sld [smem:[#allocation2 + $0x34]]
    %s244 = sld [smem:[#allocation2 + $0x54]]
    %v245 = vstv %s242
    %v246 = vmul.f32 %v245, %v23
    %v247 = vstv %s243
    %v248 = vadd.f32 %v246, %v247
    %v249 = vtanh.pop %v248
    %v250 = vstv %s244
    %v251 = vmul.f32 %v250, %v249
    %v252 = vadd.f32 %v230, %v251
    %s253 = sld [smem:[#allocation2 + $0x15]]
    %s254 = sld [smem:[#allocation2 + $0x35]]
    %s255 = sld [smem:[#allocation2 + $0x55]]
    %v256 = vstv %s253
    %v257 = vmul.f32 %v256, %v23
    %v258 = vstv %s254
    %v259 = vadd.f32 %v257, %v258
    %v260 = vtanh.pop %v259
    %v261 = vstv %s255
    %v262 = vmul.f32 %v261, %v260
    %v263 = vadd.f32 %v241, %v262
    %s264 = sld [smem:[#allocation2 + $0x16]]
    %s265 = sld [smem:[#allocation2 + $0x36]]
    %s266 = sld [smem:[#allocation2 + $0x56]]
    %v267 = vstv %s264
    %v268 = vmul.f32 %v267, %v23
    %v269 = vstv %s265
    %v270 = vadd.f32 %v268, %v269
    %v271 = vtanh.pop %v270
    %v272 = vstv %s266
    %v273 = vmul.f32 %v272, %v271
    %v274 = vadd.f32 %v252, %v273
    %s275 = sld [smem:[#allocation2 + $0x17]]
    %s276 = sld [smem:[#allocation2 + $0x37]]
    %s277 = sld [smem:[#allocation2 + $0x57]]
    %v278 = vstv %s275
    %v279 = vmul.f32 %v278, %v23
    %v280 = vstv %s276
    %v281 = vadd.f32 %v279, %v280
    %v282 = vtanh.pop %v281
    %v283 = vstv %s277
    %v284 = vmul.f32 %v283, %v282
    %v285 = vadd.f32 %v263, %v284
    %s286 = sld [smem:[#allocation2 + $0x18]]
    %s287 = sld [smem:[#allocation2 + $0x38]]
    %s288 = sld [smem:[#allocation2 + $0x58]]
    %v289 = vstv %s286
    %v290 = vmul.f32 %v289, %v23
    %v291 = vstv %s287
    %v292 = vadd.f32 %v290, %v291
    %v293 = vtanh.pop %v292
    %v294 = vstv %s288
    %v295 = vmul.f32 %v294, %v293
    %v296 = vadd.f32 %v274, %v295
    %s297 = sld [smem:[#allocation2 + $0x19]]
    %s298 = sld [smem:[#allocation2 + $0x39]]
    %s299 = sld [smem:[#allocation2 + $0x59]]
    %v300 = vstv %s297
    %v301 = vmul.f32 %v300, %v23
    %v302 = vstv %s298
    %v303 = vadd.f32 %v301, %v302
    %v304 = vtanh.pop %v303
    %v305 = vstv %s299
    %v306 = vmul.f32 %v305, %v304
    %v307 = vadd.f32 %v285, %v306
    %s308 = sld [smem:[#allocation2 + $0x1a]]
    %s309 = sld [smem:[#allocation2 + $0x3a]]
    %s310 = sld [smem:[#allocation2 + $0x5a]]
    %v311 = vstv %s308
    %v312 = vmul.f32 %v311, %v23
    %v313 = vstv %s309
    %v314 = vadd.f32 %v312, %v313
    %v315 = vtanh.pop %v314
    %v316 = vstv %s310
    %v317 = vmul.f32 %v316, %v315
    %v318 = vadd.f32 %v296, %v317
    %s319 = sld [smem:[#allocation2 + $0x1b]]
    %s320 = sld [smem:[#allocation2 + $0x3b]]
    %s321 = sld [smem:[#allocation2 + $0x5b]]
    %v322 = vstv %s319
    %v323 = vmul.f32 %v322, %v23
    %v324 = vstv %s320
    %v325 = vadd.f32 %v323, %v324
    %v326 = vtanh.pop %v325
    %v327 = vstv %s321
    %v328 = vmul.f32 %v327, %v326
    %v329 = vadd.f32 %v307, %v328
    %s330 = sld [smem:[#allocation2 + $0x1c]]
    %s331 = sld [smem:[#allocation2 + $0x3c]]
    %s332 = sld [smem:[#allocation2 + $0x5c]]
    %v333 = vstv %s330
    %v334 = vmul.f32 %v333, %v23
    %v335 = vstv %s331
    %v336 = vadd.f32 %v334, %v335
    %v337 = vtanh.pop %v336
    %v338 = vstv %s332
    %v339 = vmul.f32 %v338, %v337
    %v340 = vadd.f32 %v318, %v339
    %s341 = sld [smem:[#allocation2 + $0x1d]]
    %s342 = sld [smem:[#allocation2 + $0x3d]]
    %s343 = sld [smem:[#allocation2 + $0x5d]]
    %v344 = vstv %s341
    %v345 = vmul.f32 %v344, %v23
    %v346 = vstv %s342
    %v347 = vadd.f32 %v345, %v346
    %v348 = vtanh.pop %v347
    %v349 = vstv %s343
    %v350 = vmul.f32 %v349, %v348
    %v351 = vadd.f32 %v329, %v350
    %s352 = sld [smem:[#allocation2 + $0x1e]]
    %s353 = sld [smem:[#allocation2 + $0x3e]]
    %s354 = sld [smem:[#allocation2 + $0x5e]]
    %v355 = vstv %s352
    %v356 = vmul.f32 %v355, %v23
    %v357 = vstv %s353
    %v358 = vadd.f32 %v356, %v357
    %v359 = vtanh.pop %v358
    %v360 = vstv %s354
    %v361 = vmul.f32 %v360, %v359
    %v362 = vadd.f32 %v340, %v361
    %s363 = sld [smem:[#allocation2 + $0x1f]]
    %s364 = sld [smem:[#allocation2 + $0x3f]]
    %s365 = sld [smem:[#allocation2 + $0x5f]]
    %v366 = vstv %s363
    %v367 = vmul.f32 %v366, %v23
    %v368 = vstv %s364
    %v369 = vadd.f32 %v367, %v368
    %v370 = vtanh.pop %v369
    %v371 = vstv %s365
    %v372 = vmul.f32 %v371, %v370
    %v373 = vadd.f32 %v351, %v372
    %v374 = vadd.f32 %v362, %v373
    %s375 = sld [smem:[#allocation2 + $0x60]]
    %v376 = vstv %s375
    %v377 = vadd.f32 %v374, %v376
    %v378 = vxor.u32 %v377, 2147483648
    %v379 = vmul.f32 %v378, 1.442695
    %v380 = vpow.pop %v379
    %v381 = vadd.f32 %v380, 1.0
    %v382 = vrcp.pop %v381
    %v383 = vmul.f32 1.0, %v382
    %384 = vst [vmem:[#allocation5] sm:$0x3] %v383
    // Predicated region
    $region14: #{tpu_custom_call.1} parent=1 // pred_check
      _
    $region15: #{tpu_custom_call.1} parent=1 // pred_check_branch
      %386 = sbr.rel (0) target = $region17
    $region16: #{tpu_custom_call.1} parent=1 // pred_region
      %s388 = ssub.s32 32, 32
      %389 = vsyncadd [#allocation3], %s388
      %s391 = sshll.u32 [#allocation5], 4
      %s392 = int_to_ptr.vmem [resolvable:$true] %s391
      %394 = dma.vmem_to_hbm [thread:$0]  %s392, 32, %s2, [#allocation3]
    $region17: #{tpu_custom_call.1} parent=1 // pred_fallthru
      _
    // Predicated region
    $region18: #{tpu_custom_call.1} parent=1 // pred_check
      _
    $region19: #{tpu_custom_call.1} parent=1 // pred_check_branch
      %396 = sbr.rel (0) target = $region21
    $region20: #{tpu_custom_call.1} parent=1 // pred_region
      %397 = dma.done [#allocation3], 32
    $region21: #{tpu_custom_call.1} parent=1 // pred_fallthru
      _
    %398 = vsyncpa [#allocation3], 1
    %399 = vsyncpa [#allocation4], 1

</llo_original>
